<compile_context>
chip_gen: v6e
topology: v6e:2x2x1
jax: 0.10.0
libtpu: 0.0.40
codegen_flags: <defaults>
</compile_context>

<pallas_src>
import functools

import jax
import jax.numpy as jnp
from jax.experimental import pallas as pl
from jax.experimental.pallas import tpu as pltpu

LN_EPS = 1e-5                      # torch.nn.LayerNorm default
_LANE = 128                        # TPU lane width
_SUBLANE = 8                       # f32 sublane granularity
_VMEM_BUDGET = 20 * 1024 * 1024    # per-block working-set target (v7x-safe)
_VMEM_LIMIT = 48 * 1024 * 1024     # scoped VMEM limit (valid on 64 MiB v7x)
_TOKEN_CAP = 4096                  # max tokens per grid step


def _round_up(n, m):
    return ((n + m - 1) // m) * m


def _largest_divisor_leq(n, cap):
    cap = max(1, min(n, cap))
    for d in range(cap, 0, -1):
        if n % d == 0:
            return d
    return 1


def _pick_row_tile(h, w, per_token_bytes):
    """Largest divisor of h whose row-block stays inside the VMEM budget."""
    cap_tokens = max(w, min(_TOKEN_CAP, _VMEM_BUDGET // max(per_token_bytes, 1)))
    cap_rows = max(1, cap_tokens // max(w, 1))
    return _largest_divisor_leq(h, cap_rows)


def _pick_token_tile(m, per_token_bytes):
    """Token tile for the fallback path: divisor of m, 8-row aligned."""
    cap = max(1, min(_TOKEN_CAP, _VMEM_BUDGET // max(per_token_bytes, 1)))
    if m <= cap:
        return m
    for d in range(cap, 0, -1):
        if m % d == 0 and d % _SUBLANE == 0:
            return d
    # TODO(synk): masked-tail handling for token counts with no 8-aligned divisor.
    return m


def _fused_patch_merge_kernel(x_ref, w_ref, g_ref, b_ref, o_ref, *, compute_dtype):
    """Pixel-unshuffle regroup + LayerNorm + Linear(no bias), all in VMEM.

    x_ref : (1, tm_h, s, w, s*C)   raw NHWC rows (free view of the input)
    w_ref : (s, s*C, O_pad)        reduction weight, rows regrouped per s_h slab
    g_ref : (s, 1, s*C)            LayerNorm gamma, regrouped to match
    b_ref : (s, 1, s*C)            LayerNorm beta,  regrouped to match
    o_ref : (tm_h * w, O_pad)
    """
    _, tm_h, s, w, sC = x_ref.shape
    tokens = tm_h * w
    inv_d = 1.0 / (s * sC)

    def slab(sh):
        # One s_h slab; its lanes are already (s_w, c)-ordered.  The reshape
        # is a pure layout no-op because w % 8 == 0 (checked by the wrapper).
        z = x_ref[0, :, sh, :, :].astype(jnp.float32)      # (tm_h, w, s*C)
        return z.reshape(tokens, sC)

    # LayerNorm statistics over the full merged-channel dim, in f32.
    tot = slab(0).sum(axis=-1, keepdims=True)
    for sh in range(1, s):
        tot += slab(sh).sum(axis=-1, keepdims=True)
    mean = tot * inv_d

    ssq = jnp.zeros_like(mean)
    for sh in range(s):
        c = slab(sh) - mean
        ssq += jnp.sum(c * c, axis=-1, keepdims=True)
    inv = jax.lax.rsqrt(ssq * inv_d + LN_EPS)

    # Normalize + affine (f32), reduce on the MXU (compute_dtype, f32 accum).
    acc = jnp.zeros((tokens, o_ref.shape[-1]), jnp.float32)
    for sh in range(s):
        y = (slab(sh) - mean) * inv * g_ref[sh].astype(jnp.float32) \
            + b_ref[sh].astype(jnp.float32)
        acc += jnp.dot(y.astype(compute_dtype), w_ref[sh],
                       preferred_element_type=jnp.float32)
    o_ref[...] = acc.astype(o_ref.dtype)


def _token_patch_merge_kernel(x_ref, w_ref, g_ref, b_ref, o_ref, *, compute_dtype):
    """Fallback: LayerNorm(last dim) + Linear(no bias) on pre-regrouped tokens."""
    x = x_ref[...].astype(jnp.float32)                     # (tm, D)
    mean = jnp.mean(x, axis=-1, keepdims=True)
    cen = x - mean
    var = jnp.mean(cen * cen, axis=-1, keepdims=True)
    y = cen * jax.lax.rsqrt(var + LN_EPS) * g_ref[...].astype(jnp.float32) \
        + b_ref[...].astype(jnp.float32)
    o_ref[...] = jnp.dot(y.astype(compute_dtype), w_ref[...],
                         preferred_element_type=jnp.float32).astype(o_ref.dtype)


def patch_merging_forward(x, gamma, beta, weight, *, scale_factor=2,
                          compute_dtype=jnp.bfloat16):
    """
    x:      (B, H, W, C) channels-last (f32 or bf16 activations).
    gamma:  (scale**2 * C,)                 LayerNorm weight
    beta:   (scale**2 * C,)                 LayerNorm bias
    weight: (scale**2 * C, out_channels)    reduction weight (torch Linear.weight.T)
    """
    B, H, W, C = x.shape
    s = scale_factor
    assert H % s == 0 and W % s == 0, "spatial dims must be divisible by scale"
    h, w = H // s, W // s
    D = s * s * C
    O = weight.shape[1]
    assert weight.shape[0] == D and gamma.shape == (D,) and beta.shape == (D,)

    M = B * h * w
    out_dtype = x.dtype
    o_pad = _round_up(O, _LANE)                 # lane-dense output stores
    w_pad = weight if o_pad == O else jnp.pad(weight, ((0, 0), (0, o_pad - O)))
    w_pad = w_pad.astype(compute_dtype)         # DMA'd once, at compute width

    in_item = jnp.dtype(x.dtype).itemsize
    out_item = jnp.dtype(out_dtype).itemsize
    per_token_bytes = 2 * D * in_item + 2 * o_pad * out_item + 4 * (D + o_pad)

    cost = pl.CostEstimate(
        flops=2 * M * D * o_pad,
        transcendentals=M,
        bytes_accessed=(x.size * in_item + M * o_pad * out_item
                        + D * o_pad * jnp.dtype(compute_dtype).itemsize),
    )

    if w % _SUBLANE == 0:
        # ---------------- fused path: regroup + LN + reduce in one kernel ---
        sC = s * C
        x5 = x.reshape(B, h, s, w, sC)          # free view of NHWC
        # Feature order inside an s_h slab is (s_w, c); build matching params.
        perm = jnp.asarray(
            [[c * s * s + sh * s + sw for sw in range(s) for c in range(C)]
             for sh in range(s)], dtype=jnp.int32)                  # (s, s*C)
        w_all = w_pad[perm]                                         # (s, s*C, o_pad)
        g_all = gamma[perm].reshape(s, 1, sC).astype(jnp.float32)
        b_all = beta[perm].reshape(s, 1, sC).astype(jnp.float32)

        tm_h = _pick_row_tile(h, w, per_token_bytes)
        n_ht = h // tm_h

        out2d = pl.pallas_call(
            functools.partial(_fused_patch_merge_kernel,
                              compute_dtype=compute_dtype),
            out_shape=jax.ShapeDtypeStruct((M, o_pad), out_dtype),
            grid_spec=pltpu.PrefetchScalarGridSpec(
                num_scalar_prefetch=0,
                grid=(B, n_ht),
                in_specs=[
                    pl.BlockSpec((1, tm_h, s, w, sC),
                                 lambda b, i: (b, i, 0, 0, 0)),
                    pl.BlockSpec((s, sC, o_pad), lambda b, i: (0, 0, 0)),
                    pl.BlockSpec((s, 1, sC), lambda b, i: (0, 0, 0)),
                    pl.BlockSpec((s, 1, sC), lambda b, i: (0, 0, 0)),
                ],
                out_specs=pl.BlockSpec((tm_h * w, o_pad),
                                       lambda b, i: (b * n_ht + i, 0)),
            ),
            compiler_params=pltpu.CompilerParams(
                dimension_semantics=("parallel", "parallel"),
                vmem_limit_bytes=_VMEM_LIMIT,
            ),
            cost_estimate=cost,
        )(x5, w_all, g_all, b_all)
    else:
        # -------- fallback: host-side regroup, then LN + reduction kernel ---
        # TODO(synk): extend the fused path to (W//s) % 8 != 0 (needs an
        # in-kernel relayout or masked tail) to avoid this extra HBM pass.
        xr = x.reshape(B, h, s, w, s, C)
        xr = jnp.transpose(xr, (0, 1, 3, 5, 2, 4)).reshape(M, D)
        g2 = gamma.reshape(1, D).astype(jnp.float32)
        b2 = beta.reshape(1, D).astype(jnp.float32)
        tm = _pick_token_tile(M, per_token_bytes)

        out2d = pl.pallas_call(
            functools.partial(_token_patch_merge_kernel,
                              compute_dtype=compute_dtype),
            out_shape=jax.ShapeDtypeStruct((M, o_pad), out_dtype),
            grid_spec=pltpu.PrefetchScalarGridSpec(
                num_scalar_prefetch=0,
                grid=(M // tm,),
                in_specs=[
                    pl.BlockSpec((tm, D), lambda i: (i, 0)),
                    pl.BlockSpec((D, o_pad), lambda i: (0, 0)),
                    pl.BlockSpec((1, D), lambda i: (0, 0)),
                    pl.BlockSpec((1, D), lambda i: (0, 0)),
                ],
                out_specs=pl.BlockSpec((tm, o_pad), lambda i: (i, 0)),
            ),
            compiler_params=pltpu.CompilerParams(
                dimension_semantics=("parallel",),
                vmem_limit_bytes=_VMEM_LIMIT,
            ),
            cost_estimate=cost,
        )(xr, w_pad, g2, b2)

    if o_pad != O:
        out2d = out2d[:, :O]
    # The reference module's final reshape uses c = scale**2 * in_channels,
    # which equals out_channels whenever that reshape is valid, so (B,h,w,O)
    # reproduces the module exactly in every case where the module runs.
    return out2d.reshape(B, h, w, O)


def _reference(x, gamma, beta, weight, *, scale_factor=2):
    B, H, W, C = x.shape
    s = scale_factor
    h, w = H // s, W // s
    D = s * s * C
    xr = x.reshape(B, h, s, w, s, C)
    xr = jnp.transpose(xr, (0, 1, 3, 5, 2, 4)).reshape(B, h * w, D)
    xf = xr.astype(jnp.float32)
    mean = jnp.mean(xf, axis=-1, keepdims=True)
    var = jnp.mean((xf - mean) ** 2, axis=-1, keepdims=True)
    xn = (xf - mean) / jnp.sqrt(var + LN_EPS)
    y = xn * gamma + beta
    y = y @ weight.astype(jnp.float32)
    return y.reshape(B, h, w, weight.shape[1]).astype(x.dtype)


if __name__ == "__main__":
    scale = 2

    def make_inputs(key, B, C, H, W):
        D = scale * scale * C
        out_channels = D     # module's final reshape requires this equality
        kx, kw, kg, kb = jax.random.split(key, 4)
        x = jax.random.normal(kx, (B, H, W, C), dtype=jnp.float32)
        weight = jax.random.normal(kw, (D, out_channels), dtype=jnp.float32) * 0.05
        gamma = 1.0 + 0.01 * jax.random.normal(kg, (D,), dtype=jnp.float32)
        beta = 0.01 * jax.random.normal(kb, (D,), dtype=jnp.float32)
        return x, gamma, beta, weight

    # 1) Fused path, f32 matmul: exactness check vs the JAX reference.
    x, gamma, beta, weight = make_inputs(jax.random.PRNGKey(0), 2, 4, 16, 16)
    out = jax.block_until_ready(
        patch_merging_forward(x, gamma, beta, weight, scale_factor=scale,
                              compute_dtype=jnp.float32))
    ref = _reference(x, gamma, beta, weight, scale_factor=scale)
    assert out.shape == (2, 8, 8, 16)
    assert jnp.allclose(out, ref, atol=1e-4, rtol=1e-4), "fused f32 mismatch"

    # 2) Fused path, bf16 MXU matmul (the performant configuration).
    out_bf = jax.block_until_ready(
        patch_merging_forward(x, gamma, beta, weight, scale_factor=scale,
                              compute_dtype=jnp.bfloat16))
    assert jnp.allclose(out_bf, ref, atol=2e-2, rtol=2e-2), "fused bf16 mismatch"

    # 3) Fallback path ((W//s) % 8 != 0), f32.
    x2, gamma2, beta2, weight2 = make_inputs(jax.random.PRNGKey(1), 2, 4, 12, 12)
    out2 = jax.block_until_ready(
        patch_merging_forward(x2, gamma2, beta2, weight2, scale_factor=scale,
                              compute_dtype=jnp.float32))
    ref2 = _reference(x2, gamma2, beta2, weight2, scale_factor=scale)
    assert out2.shape == (2, 6, 6, 16)
    assert jnp.allclose(out2, ref2, atol=1e-4, rtol=1e-4), "fallback mismatch"

    print("KERNEL_OK")
</pallas_src>

<mosaic_0001>
module attributes {stable_mosaic.version = 11 : i64} {
  func.func @_fused_patch_merge_kernel(%arg0: i32, %arg1: i32, %arg2: memref<1x8x2x8x8xf32, #tpu.memory_space<vmem>>, %arg3: memref<2x8x128xf32, #tpu.memory_space<vmem>>, %arg4: memref<2x1x8xf32, #tpu.memory_space<vmem>>, %arg5: memref<2x1x8xf32, #tpu.memory_space<vmem>>, %arg6: memref<64x128xf32, #tpu.memory_space<vmem>>) attributes {dimension_semantics = [#tpu.dimension_semantics<parallel>, #tpu.dimension_semantics<parallel>], iteration_bounds = array<i64: 2, 1>, scalar_prefetch = 0 : i64, scratch_operands = 0 : i64, tpu.core_type = #tpu.core_type<tc>, window_params = [{transform_indices = @transform_0, window_bounds = array<i64: 1, 8, 2, 8, 8>}, {pipeline_mode = #tpu.pipeline_mode<synchronous>, transform_indices = @transform_1, window_bounds = array<i64: 2, 8, 128>}, {pipeline_mode = #tpu.pipeline_mode<synchronous>, transform_indices = @transform_2, window_bounds = array<i64: 2, 1, 8>}, {pipeline_mode = #tpu.pipeline_mode<synchronous>, transform_indices = @transform_3, window_bounds = array<i64: 2, 1, 8>}, {transform_indices = @transform_4, window_bounds = array<i64: 64, 128>}]} {
    %c0 = arith.constant 0 : index
    %c0_0 = arith.constant 0 : index
    %c0_1 = arith.constant 0 : index
    %c0_2 = arith.constant 0 : index
    %c0_3 = arith.constant 0 : index
    %0 = vector.load %arg2[%c0, %c0_0, %c0_1, %c0_2, %c0_3] : memref<1x8x2x8x8xf32, #tpu.memory_space<vmem>>, vector<1x8x1x8x8xf32>
    %1 = vector.shape_cast %0 : vector<1x8x1x8x8xf32> to vector<8x8x8xf32>
    %2 = vector.shape_cast %1 : vector<8x8x8xf32> to vector<64x8xf32>
    %cst = arith.constant dense<0.000000e+00> : vector<64xf32>
    %3 = vector.multi_reduction <add>, %2, %cst [1] : vector<64x8xf32> to vector<64xf32>
    %4 = vector.shape_cast %3 : vector<64xf32> to vector<64x1xf32>
    %c0_4 = arith.constant 0 : index
    %c0_5 = arith.constant 0 : index
    %c1 = arith.constant 1 : index
    %c0_6 = arith.constant 0 : index
    %c0_7 = arith.constant 0 : index
    %5 = vector.load %arg2[%c0_4, %c0_5, %c1, %c0_6, %c0_7] : memref<1x8x2x8x8xf32, #tpu.memory_space<vmem>>, vector<1x8x1x8x8xf32>
    %6 = vector.shape_cast %5 : vector<1x8x1x8x8xf32> to vector<8x8x8xf32>
    %7 = vector.shape_cast %6 : vector<8x8x8xf32> to vector<64x8xf32>
    %cst_8 = arith.constant dense<0.000000e+00> : vector<64xf32>
    %8 = vector.multi_reduction <add>, %7, %cst_8 [1] : vector<64x8xf32> to vector<64xf32>
    %9 = vector.shape_cast %8 : vector<64xf32> to vector<64x1xf32>
    %10 = arith.addf %4, %9 : vector<64x1xf32>
    %cst_9 = arith.constant 6.250000e-02 : f32
    %11 = vector.broadcast %cst_9 : f32 to vector<64x1xf32>
    %12 = arith.mulf %10, %11 : vector<64x1xf32>
    %cst_10 = arith.constant 0.000000e+00 : f32
    %13 = vector.broadcast %cst_10 : f32 to vector<64x1xf32>
    %c0_11 = arith.constant 0 : index
    %c0_12 = arith.constant 0 : index
    %c0_13 = arith.constant 0 : index
    %c0_14 = arith.constant 0 : index
    %c0_15 = arith.constant 0 : index
    %14 = vector.load %arg2[%c0_11, %c0_12, %c0_13, %c0_14, %c0_15] : memref<1x8x2x8x8xf32, #tpu.memory_space<vmem>>, vector<1x8x1x8x8xf32>
    %15 = vector.shape_cast %14 : vector<1x8x1x8x8xf32> to vector<8x8x8xf32>
    %16 = vector.shape_cast %15 : vector<8x8x8xf32> to vector<64x8xf32>
    %17 = vector.broadcast %12 : vector<64x1xf32> to vector<64x8xf32>
    %18 = arith.subf %16, %17 : vector<64x8xf32>
    %19 = arith.mulf %18, %18 : vector<64x8xf32>
    %cst_16 = arith.constant dense<0.000000e+00> : vector<64xf32>
    %20 = vector.multi_reduction <add>, %19, %cst_16 [1] : vector<64x8xf32> to vector<64xf32>
    %21 = vector.shape_cast %20 : vector<64xf32> to vector<64x1xf32>
    %22 = arith.addf %13, %21 : vector<64x1xf32>
    %c0_17 = arith.constant 0 : index
    %c0_18 = arith.constant 0 : index
    %c1_19 = arith.constant 1 : index
    %c0_20 = arith.constant 0 : index
    %c0_21 = arith.constant 0 : index
    %23 = vector.load %arg2[%c0_17, %c0_18, %c1_19, %c0_20, %c0_21] : memref<1x8x2x8x8xf32, #tpu.memory_space<vmem>>, vector<1x8x1x8x8xf32>
    %24 = vector.shape_cast %23 : vector<1x8x1x8x8xf32> to vector<8x8x8xf32>
    %25 = vector.shape_cast %24 : vector<8x8x8xf32> to vector<64x8xf32>
    %26 = vector.broadcast %12 : vector<64x1xf32> to vector<64x8xf32>
    %27 = arith.subf %25, %26 : vector<64x8xf32>
    %28 = arith.mulf %27, %27 : vector<64x8xf32>
    %cst_22 = arith.constant dense<0.000000e+00> : vector<64xf32>
    %29 = vector.multi_reduction <add>, %28, %cst_22 [1] : vector<64x8xf32> to vector<64xf32>
    %30 = vector.shape_cast %29 : vector<64xf32> to vector<64x1xf32>
    %31 = arith.addf %22, %30 : vector<64x1xf32>
    %cst_23 = arith.constant 6.250000e-02 : f32
    %32 = vector.broadcast %cst_23 : f32 to vector<64x1xf32>
    %33 = arith.mulf %31, %32 : vector<64x1xf32>
    %cst_24 = arith.constant 9.99999974E-6 : f32
    %34 = vector.broadcast %cst_24 : f32 to vector<64x1xf32>
    %35 = arith.addf %33, %34 : vector<64x1xf32>
    %36 = math.rsqrt %35 : vector<64x1xf32>
    %cst_25 = arith.constant 0.000000e+00 : f32
    %37 = vector.broadcast %cst_25 : f32 to vector<64x128xf32>
    %c0_26 = arith.constant 0 : index
    %c0_27 = arith.constant 0 : index
    %c0_28 = arith.constant 0 : index
    %c0_29 = arith.constant 0 : index
    %c0_30 = arith.constant 0 : index
    %38 = vector.load %arg2[%c0_26, %c0_27, %c0_28, %c0_29, %c0_30] : memref<1x8x2x8x8xf32, #tpu.memory_space<vmem>>, vector<1x8x1x8x8xf32>
    %39 = vector.shape_cast %38 : vector<1x8x1x8x8xf32> to vector<8x8x8xf32>
    %40 = vector.shape_cast %39 : vector<8x8x8xf32> to vector<64x8xf32>
    %41 = vector.broadcast %12 : vector<64x1xf32> to vector<64x8xf32>
    %42 = arith.subf %40, %41 : vector<64x8xf32>
    %43 = vector.broadcast %36 : vector<64x1xf32> to vector<64x8xf32>
    %44 = arith.mulf %42, %43 : vector<64x8xf32>
    %c0_31 = arith.constant 0 : index
    %c0_32 = arith.constant 0 : index
    %c0_33 = arith.constant 0 : index
    %45 = vector.load %arg4[%c0_31, %c0_32, %c0_33] : memref<2x1x8xf32, #tpu.memory_space<vmem>>, vector<1x1x8xf32>
    %46 = vector.shape_cast %45 : vector<1x1x8xf32> to vector<1x8xf32>
    %47 = vector.broadcast %46 : vector<1x8xf32> to vector<64x8xf32>
    %48 = arith.mulf %44, %47 : vector<64x8xf32>
    %c0_34 = arith.constant 0 : index
    %c0_35 = arith.constant 0 : index
    %c0_36 = arith.constant 0 : index
    %49 = vector.load %arg5[%c0_34, %c0_35, %c0_36] : memref<2x1x8xf32, #tpu.memory_space<vmem>>, vector<1x1x8xf32>
    %50 = vector.shape_cast %49 : vector<1x1x8xf32> to vector<1x8xf32>
    %51 = vector.broadcast %50 : vector<1x8xf32> to vector<64x8xf32>
    %52 = arith.addf %48, %51 : vector<64x8xf32>
    %c0_37 = arith.constant 0 : index
    %c0_38 = arith.constant 0 : index
    %c0_39 = arith.constant 0 : index
    %53 = vector.load %arg3[%c0_37, %c0_38, %c0_39] : memref<2x8x128xf32, #tpu.memory_space<vmem>>, vector<1x8x128xf32>
    %54 = vector.shape_cast %53 : vector<1x8x128xf32> to vector<8x128xf32>
    %cst_40 = arith.constant dense<0.000000e+00> : vector<64x128xf32>
    %55 = tpu.matmul %52, %54, %cst_40 {dimension_numbers = #tpu.dot_dimension_numbers<[1], [0], [0], [1], [0, 0, 1, 1], [], []>} : vector<64x8xf32>, vector<8x128xf32>, vector<64x128xf32> -> vector<64x128xf32>
    %56 = arith.addf %37, %55 : vector<64x128xf32>
    %c0_41 = arith.constant 0 : index
    %c0_42 = arith.constant 0 : index
    %c1_43 = arith.constant 1 : index
    %c0_44 = arith.constant 0 : index
    %c0_45 = arith.constant 0 : index
    %57 = vector.load %arg2[%c0_41, %c0_42, %c1_43, %c0_44, %c0_45] : memref<1x8x2x8x8xf32, #tpu.memory_space<vmem>>, vector<1x8x1x8x8xf32>
    %58 = vector.shape_cast %57 : vector<1x8x1x8x8xf32> to vector<8x8x8xf32>
    %59 = vector.shape_cast %58 : vector<8x8x8xf32> to vector<64x8xf32>
    %60 = vector.broadcast %12 : vector<64x1xf32> to vector<64x8xf32>
    %61 = arith.subf %59, %60 : vector<64x8xf32>
    %62 = vector.broadcast %36 : vector<64x1xf32> to vector<64x8xf32>
    %63 = arith.mulf %61, %62 : vector<64x8xf32>
    %c1_46 = arith.constant 1 : index
    %c0_47 = arith.constant 0 : index
    %c0_48 = arith.constant 0 : index
    %64 = vector.load %arg4[%c1_46, %c0_47, %c0_48] : memref<2x1x8xf32, #tpu.memory_space<vmem>>, vector<1x1x8xf32>
    %65 = vector.shape_cast %64 : vector<1x1x8xf32> to vector<1x8xf32>
    %66 = vector.broadcast %65 : vector<1x8xf32> to vector<64x8xf32>
    %67 = arith.mulf %63, %66 : vector<64x8xf32>
    %c1_49 = arith.constant 1 : index
    %c0_50 = arith.constant 0 : index
    %c0_51 = arith.constant 0 : index
    %68 = vector.load %arg5[%c1_49, %c0_50, %c0_51] : memref<2x1x8xf32, #tpu.memory_space<vmem>>, vector<1x1x8xf32>
    %69 = vector.shape_cast %68 : vector<1x1x8xf32> to vector<1x8xf32>
    %70 = vector.broadcast %69 : vector<1x8xf32> to vector<64x8xf32>
    %71 = arith.addf %67, %70 : vector<64x8xf32>
    %c1_52 = arith.constant 1 : index
    %c0_53 = arith.constant 0 : index
    %c0_54 = arith.constant 0 : index
    %72 = vector.load %arg3[%c1_52, %c0_53, %c0_54] : memref<2x8x128xf32, #tpu.memory_space<vmem>>, vector<1x8x128xf32>
    %73 = vector.shape_cast %72 : vector<1x8x128xf32> to vector<8x128xf32>
    %cst_55 = arith.constant dense<0.000000e+00> : vector<64x128xf32>
    %74 = tpu.matmul %71, %73, %cst_55 {dimension_numbers = #tpu.dot_dimension_numbers<[1], [0], [0], [1], [0, 0, 1, 1], [], []>} : vector<64x8xf32>, vector<8x128xf32>, vector<64x128xf32> -> vector<64x128xf32>
    %75 = arith.addf %56, %74 : vector<64x128xf32>
    %c0_56 = arith.constant 0 : index
    %c0_57 = arith.constant 0 : index
    %76 = vector.load %arg6[%c0_56, %c0_57] : memref<64x128xf32, #tpu.memory_space<vmem>>, vector<64x128xf32>
    tpu.vector_store %arg6[%c0_56, %c0_57], %75 {strides = array<i32>} : memref<64x128xf32, #tpu.memory_space<vmem>>, vector<64x128xf32>,
    return
  }
  func.func @transform_0(%arg0: i32, %arg1: i32) -> (i32, i32, i32, i32, i32) {
    %c0_i32 = arith.constant 0 : i32
    %c0_i32_0 = arith.constant 0 : i32
    %c0_i32_1 = arith.constant 0 : i32
    %c0_i32_2 = arith.constant 0 : i32
    return %arg0, %arg1, %c0_i32, %c0_i32_0, %c0_i32_1 : i32, i32, i32, i32, i32
  }
  func.func @transform_1(%arg0: i32, %arg1: i32) -> (i32, i32, i32) {
    %c0_i32 = arith.constant 0 : i32
    %c0_i32_0 = arith.constant 0 : i32
    %c0_i32_1 = arith.constant 0 : i32
    %c0_i32_2 = arith.constant 0 : i32
    return %c0_i32, %c0_i32_0, %c0_i32_1 : i32, i32, i32
  }
  func.func @transform_2(%arg0: i32, %arg1: i32) -> (i32, i32, i32) {
    %c0_i32 = arith.constant 0 : i32
    %c0_i32_0 = arith.constant 0 : i32
    %c0_i32_1 = arith.constant 0 : i32
    %c0_i32_2 = arith.constant 0 : i32
    return %c0_i32, %c0_i32_0, %c0_i32_1 : i32, i32, i32
  }
  func.func @transform_3(%arg0: i32, %arg1: i32) -> (i32, i32, i32) {
    %c0_i32 = arith.constant 0 : i32
    %c0_i32_0 = arith.constant 0 : i32
    %c0_i32_1 = arith.constant 0 : i32
    %c0_i32_2 = arith.constant 0 : i32
    return %c0_i32, %c0_i32_0, %c0_i32_1 : i32, i32, i32
  }
  func.func @transform_4(%arg0: i32, %arg1: i32) -> (i32, i32) {
    %c1_i32 = arith.constant 1 : i32
    %0 = arith.muli %arg0, %c1_i32 : i32
    %1 = arith.addi %0, %arg1 : i32
    %c0_i32 = arith.constant 0 : i32
    %c0_i32_0 = arith.constant 0 : i32
    return %1, %c0_i32 : i32, i32
  }
}

</mosaic_0001>

<llo_original>
// kernel: tpu_custom_call.1
$region0: #{tpu_custom_call.1}
  #allocation0 [shape = 'u32[]', space=smem, size = 0x4, offset = 0x4, fixed_abs, tag = 'smem constant byte address 0x4 - core index']
  #allocation1 [shape = 'u32[144,128]{1,0:T(1,128)}', space=vmem, size = 0x12000, scoped, tag = 'internal scratch']
  %s0 = inlined_call_operand.hbm [shape: f32[2,8,2,8,8], index: 0, kind: input, shape index: {}]
  %s1 = inlined_call_operand.hbm [shape: f32[2,8,128], index: 1, kind: input, shape index: {}]
  %s2 = inlined_call_operand.vmem [shape: f32[2,1,8], index: 2, kind: input, shape index: {}]
  %s3 = inlined_call_operand.vmem [shape: f32[2,1,8], index: 3, kind: input, shape index: {}]
  %s4 = inlined_call_operand.hbm [shape: f32[128,128], index: 4, kind: output, shape index: {}]
  %s5 = sld [smem:[#allocation0]]
  $region57: #{tpu_custom_call.1} parent=0
    _
  %s7 = ssub.s32 1, %s5
  %s8 = scalar_select 0, %s7, %s5
  $region1: #{tpu_custom_call.1} parent=0
    #allocation2 [shape = 'u8[131072]{0}', space=vmem, size = 0x20000, scoped, tag = 'input window, operand 0']
    #allocation3 [shape = 's32[2]{0}', space=sflag, size = 0x8, scoped, tag = 'scoped memory for tpu_custom_call.1']
    #allocation4 [shape = 's32[2]{0}', space=sflag, size = 0x8, scoped, tag = 'scoped memory for tpu_custom_call.1']
    #allocation5 [shape = 'u8[8192]{0}', space=vmem, size = 0x2000, scoped, tag = 'input window, operand 1, single buffered']
    #allocation6 [shape = 's32[1]{0}', space=sflag, size = 0x4, scoped, tag = 'scoped memory for tpu_custom_call.1']
    #allocation7 [shape = 'u8[65536]{0}', space=vmem, size = 0x10000, scoped, tag = 'output window, operand 0']
    %9 = vsyncpa [#allocation3], 0
    %s10 = scalar_lea.sflag [#allocation3], 1
    %11 = vsyncpa %s10, 0
    %12 = vsyncpa [#allocation6], 0
    %13 = vsyncpa [#allocation4], 0
    %s14 = scalar_lea.sflag [#allocation4], 1
    %15 = vsyncpa %s14, 0
    loop: start=0, step=1, limit=4
    $region2: #{tpu_custom_call.1} parent=1 // loop_pre_header
      _
    $region3: #{tpu_custom_call.1} parent=1 // loop_header
      %s17 = sphi 0, %s21
      %p18 = scmp.ge.s32.totalorder %s17, 4
      %s24 = sphi 0, %s36
      %s25 = sphi 0, %s32
      %s26 = sphi 0, %s24
      %s27 = sphi 0, %s25
      %s28 = sphi 0, %s26
      %s29 = sphi 0, %s27
      %s41 = sphi 0, %s43
      %s44 = sphi 0, %s41
      %s45 = sphi 0, %s44
      %s61 = sphi 0, %s45
      %s65 = sphi 0, %s65
      %s67 = sphi 0, %s65
      %s68 = sphi 0, %s67
      %s82 = sphi 0, %s68
      %s86 = sphi 0, %s86
      %s88 = sphi 0, %s86
      %s89 = sphi 0, %s88
      %s103 = sphi 0, %s89
      %s107 = sphi 0, %s107
      %s109 = sphi 0, %s107
      %s110 = sphi 0, %s109
      %s124 = sphi 0, %s110
      %s132 = sphi 0, %s134
      %s135 = sphi 0, %s132
      %s136 = sphi 0, %s135
      %s152 = sphi 0, %s136
    $region4: #{tpu_custom_call.1} parent=1 // loop_header_branch
      %20 = sbr.rel (%p18) target = $region8
    $region5: #{tpu_custom_call.1} parent=1 // loop_body
      %s22 = ssub.s32 %s17, 1
      %s23 = ssub.s32 %s17, 2
      %s30 = sadd.s32 1, %s25
      %p31 = scmp.ge.s32.totalorder %s30, 1
      %s32 = scalar_select %p31, 0, %s30
      %s33 = sadd.s32 1, %s24
      %s34 = scalar_select %p31, %s33, %s24
      %p35 = scmp.ge.s32.totalorder %s34, 2
      %s36 = scalar_select %p35, 0, %s34
      %s37 = ssub.s32 %s24, %s36
      %s38 = ssub.s32 %s25, %s32
      %s39 = sor.u32 %s37, %s38
      %p40 = scmp.eq.s32.totalorder %s39, 0
      %s42 = sadd.s32 %s41, 1
      %s43 = scalar_select %p40, %s41, %s42
      %p46 = pneg %p40
      %p47 = scmp.eq.s32.totalorder %s17, 1
      %p48 = por %p46, %p47
      %p49 = scmp.ne.s32.totalorder %s41, %s44
      %p50 = scmp.eq.s32.totalorder %s17, 0
      %p51 = por %p49, %p50
      %p52 = scmp.ne.s32.totalorder %s41, %s44
      %p53 = scmp.eq.s32.totalorder %s22, 1
      %p54 = por %p52, %p53
      %p55 = scmp.ne.s32.totalorder %s44, %s45
      %p56 = scmp.eq.s32.totalorder %s22, 0
      %p57 = por %p55, %p56
      %p58 = scmp.ne.s32.totalorder %s44, %s45
      %p59 = scmp.eq.s32.totalorder %s23, 1
      %p60 = por %p58, %p59
      %p62 = scmp.ne.s32.totalorder %s45, %s61
      %p63 = scmp.eq.s32.totalorder %s23, 0
      %p64 = por %p62, %p63
      %s66 = sadd.s32 %s65, 1
      %p69 = scmp.eq.s32.totalorder %s17, 1
      %p70 = scmp.ne.s32.totalorder %s65, %s67
      %p71 = scmp.eq.s32.totalorder %s17, 0
      %p72 = por %p70, %p71
      %p73 = scmp.ne.s32.totalorder %s65, %s67
      %p74 = scmp.eq.s32.totalorder %s22, 1
      %p75 = por %p73, %p74
      %p76 = scmp.ne.s32.totalorder %s67, %s68
      %p77 = scmp.eq.s32.totalorder %s22, 0
      %p78 = por %p76, %p77
      %p79 = scmp.ne.s32.totalorder %s67, %s68
      %p80 = scmp.eq.s32.totalorder %s23, 1
      %p81 = por %p79, %p80
      %p83 = scmp.ne.s32.totalorder %s68, %s82
      %p84 = scmp.eq.s32.totalorder %s23, 0
      %p85 = por %p83, %p84
      %s87 = sadd.s32 %s86, 1
      %p90 = scmp.eq.s32.totalorder %s17, 1
      %p91 = scmp.ne.s32.totalorder %s86, %s88
      %p92 = scmp.eq.s32.totalorder %s17, 0
      %p93 = por %p91, %p92
      %p94 = scmp.ne.s32.totalorder %s86, %s88
      %p95 = scmp.eq.s32.totalorder %s22, 1
      %p96 = por %p94, %p95
      %p97 = scmp.ne.s32.totalorder %s88, %s89
      %p98 = scmp.eq.s32.totalorder %s22, 0
      %p99 = por %p97, %p98
      %p100 = scmp.ne.s32.totalorder %s88, %s89
      %p101 = scmp.eq.s32.totalorder %s23, 1
      %p102 = por %p100, %p101
      %p104 = scmp.ne.s32.totalorder %s89, %s103
      %p105 = scmp.eq.s32.totalorder %s23, 0
      %p106 = por %p104, %p105
      %s108 = sadd.s32 %s107, 1
      %p111 = scmp.eq.s32.totalorder %s17, 1
      %p112 = scmp.ne.s32.totalorder %s107, %s109
      %p113 = scmp.eq.s32.totalorder %s17, 0
      %p114 = por %p112, %p113
      %p115 = scmp.ne.s32.totalorder %s107, %s109
      %p116 = scmp.eq.s32.totalorder %s22, 1
      %p117 = por %p115, %p116
      %p118 = scmp.ne.s32.totalorder %s109, %s110
      %p119 = scmp.eq.s32.totalorder %s22, 0
      %p120 = por %p118, %p119
      %p121 = scmp.ne.s32.totalorder %s109, %s110
      %p122 = scmp.eq.s32.totalorder %s23, 1
      %p123 = por %p121, %p122
      %p125 = scmp.ne.s32.totalorder %s110, %s124
      %p126 = scmp.eq.s32.totalorder %s23, 0
      %p127 = por %p125, %p126
      %s128 = sadd.s32 %s24, %s25
      %s129 = sadd.s32 %s36, %s32
      %s130 = ssub.s32 %s128, %s129
      %p131 = scmp.eq.s32.totalorder %s130, 0
      %s133 = sadd.s32 %s132, 1
      %s134 = scalar_select %p131, %s132, %s133
      %p137 = pneg %p131
      %p138 = scmp.eq.s32.totalorder %s17, 1
      %p139 = por %p137, %p138
      %p140 = scmp.ne.s32.totalorder %s132, %s135
      %p141 = scmp.eq.s32.totalorder %s17, 0
      %p142 = por %p140, %p141
      %p143 = scmp.ne.s32.totalorder %s132, %s135
      %p144 = scmp.eq.s32.totalorder %s22, 1
      %p145 = por %p143, %p144
      %p146 = scmp.ne.s32.totalorder %s135, %s136
      %p147 = scmp.eq.s32.totalorder %s22, 0
      %p148 = por %p146, %p147
      %p149 = scmp.ne.s32.totalorder %s135, %s136
      %p150 = scmp.eq.s32.totalorder %s23, 1
      %p151 = por %p149, %p150
      %p153 = scmp.ne.s32.totalorder %s136, %s152
      %p154 = scmp.eq.s32.totalorder %s23, 0
      %p155 = por %p153, %p154
      %p156 = scmp.le.s32.totalorder 1, %s17
      %p157 = scmp.lt.s32.totalorder %s17, 3
      %p158 = pnand %p156, %p157
      %p159 = pneg %p158
      // Predicated region
      $region9: #{tpu_custom_call.1} parent=5 // pred_check
        _
      $region10: #{tpu_custom_call.1} parent=5 // pred_check_branch
        %161 = sbr.rel (%p158) target = $region12
      $region11: #{tpu_custom_call.1} parent=5 // pred_region
        %s162 = ssub.s32 %s17, 1
        // Predicated region
        $region13: #{tpu_custom_call.1} parent=11 // pred_check
          %p163 = pneg %p78
        $region14: #{tpu_custom_call.1} parent=11 // pred_check_branch
          %165 = sbr.rel (%p163) target = $region16
        $region15: #{tpu_custom_call.1} parent=11 // pred_region
          %s167 = ssub.s32 256, 256
          %168 = vsyncadd [#allocation6], %s167
          %s169 = sshll.u32 [#allocation5], 4
          %s170 = int_to_ptr.vmem [resolvable:$true] %s169
          %175 = dma.hbm_to_vmem [thread:$0]  %s1, 256, %s170, [#allocation6], 128, 128, 8
        $region16: #{tpu_custom_call.1} parent=11 // pred_fallthru
          _
        // Predicated region
        $region17: #{tpu_custom_call.1} parent=11 // pred_check
          %p176 = pneg %p99
        $region18: #{tpu_custom_call.1} parent=11 // pred_check_branch
          %178 = sbr.rel (%p176) target = $region20
        $region19: #{tpu_custom_call.1} parent=11 // pred_region
          _
        $region20: #{tpu_custom_call.1} parent=11 // pred_fallthru
          _
        // Predicated region
        $region21: #{tpu_custom_call.1} parent=11 // pred_check
          %p179 = pneg %p120
        $region22: #{tpu_custom_call.1} parent=11 // pred_check_branch
          %181 = sbr.rel (%p179) target = $region24
        $region23: #{tpu_custom_call.1} parent=11 // pred_region
          _
        $region24: #{tpu_custom_call.1} parent=11 // pred_fallthru
          _
      $region12: #{tpu_custom_call.1} parent=5 // pred_fallthru
        _
      %p182 = scmp.lt.s32.totalorder %s17, 2
      // Predicated region
      $region25: #{tpu_custom_call.1} parent=5 // pred_check
        %p183 = pneg %p182
      $region26: #{tpu_custom_call.1} parent=5 // pred_check_branch
        %185 = sbr.rel (%p183) target = $region28
      $region27: #{tpu_custom_call.1} parent=5 // pred_region
        // Predicated region
        $region29: #{tpu_custom_call.1} parent=27 // pred_check
          %p186 = pneg %p51
        $region30: #{tpu_custom_call.1} parent=27 // pred_check_branch
          %188 = sbr.rel (%p186) target = $region32
        $region31: #{tpu_custom_call.1} parent=27 // pred_region
          %s189 = sand.u32 %s41, 1
          %s190 = scalar_lea.sflag [#allocation3], %s189
          %s191 = sand.u32 %s41, 1
          %s192 = smul.addr %s191, 128
          %s193 = scalar_lea.vmem [#allocation2], %s192
          %s194 = smul.u32 8, %s25
          %s196 = ssub.s32 2048, 2048
          %197 = vsyncadd %s190, %s196
          %s198 = smul.addr %s194, 2
          %s199 = smul.addr %s24, 16
          %s200 = sadd.s32 %s198, %s199
          %s201 = smul.addr %s200, 128
          %s202 = scalar_lea.hbm %s0, %s201
          %s203 = sshll.u32 %s193, 4
          %s204 = int_to_ptr.vmem [resolvable:$true] %s203
          %209 = dma.hbm_to_vmem [thread:$0]  %s202, 2048, %s204, %s190, 128, 128, 8
        $region32: #{tpu_custom_call.1} parent=27 // pred_fallthru
          _
      $region28: #{tpu_custom_call.1} parent=5 // pred_fallthru
        _
      %p210 = scmp.le.s32.totalorder 1, %s17
      %p211 = scmp.lt.s32.totalorder %s17, 3
      %p212 = pnand %p210, %p211
      %p213 = pneg %p212
      // Predicated region
      $region33: #{tpu_custom_call.1} parent=5 // pred_check
        _
      $region34: #{tpu_custom_call.1} parent=5 // pred_check_branch
        %215 = sbr.rel (%p212) target = $region36
      $region35: #{tpu_custom_call.1} parent=5 // pred_region
        %s216 = ssub.s32 %s17, 1
        %s217 = sand.u32 %s44, 1
        %s218 = scalar_lea.sflag [#allocation3], %s217
        %s219 = sand.u32 %s44, 1
        %s220 = smul.addr %s219, 128
        %s221 = scalar_lea.vmem [#allocation2], %s220
        // Predicated region
        $region37: #{tpu_custom_call.1} parent=35 // pred_check
          %p222 = pneg %p57
        $region38: #{tpu_custom_call.1} parent=35 // pred_check_branch
          %224 = sbr.rel (%p222) target = $region40
        $region39: #{tpu_custom_call.1} parent=35 // pred_region
          %225 = dma.done %s218, 2048
        $region40: #{tpu_custom_call.1} parent=35 // pred_fallthru
          _
        // Predicated region
        $region41: #{tpu_custom_call.1} parent=35 // pred_check
          %p226 = pneg %p78
        $region42: #{tpu_custom_call.1} parent=35 // pred_check_branch
          %228 = sbr.rel (%p226) target = $region44
        $region43: #{tpu_custom_call.1} parent=35 // pred_region
          %229 = dma.done [#allocation6], 256
        $region44: #{tpu_custom_call.1} parent=35 // pred_fallthru
          _
        %s230 = sand.u32 %s44, 1
        %s231 = scalar_lea.sflag [#allocation3], %s230
        %s232 = sand.u32 %s44, 1
        %s233 = smul.addr %s232, 128
        %s234 = scalar_lea.vmem [#allocation2], %s233
        %p235 = pneg %p57
        %p236 = pneg %p54
        %p237 = pneg %p78
        %p238 = pneg %p75
        %p239 = pneg %p99
        %p240 = pneg %p96
        %p241 = pneg %p120
        %p242 = pneg %p117
        %p243 = pneg %p148
        %p244 = pneg %p145
        %s245 = sand.u32 %s135, 1
        %s246 = scalar_lea.sflag [#allocation4], %s245
        %s247 = sand.u32 %s135, 1
        %s248 = smul.addr %s247, 64
        %s249 = scalar_lea.vmem [#allocation7], %s248
        %s250 = smul.u32 8, %s27
        %s251 = sadd.s32 %s26, %s27
        %s252 = smul.u32 8, %s251
        %v253 = vld [vmem:[%s221] sm:$0xff]
        %v254 = vld [vmem:[%s221 + $0x10] sm:$0xff]
        %v255 = vld [vmem:[%s221 + $0x20] sm:$0xff]
        %v256 = vld [vmem:[%s221 + $0x30] sm:$0xff]
        %v257 = vld [vmem:[%s221 + $0x40] sm:$0xff]
        %v258 = vld [vmem:[%s221 + $0x50] sm:$0xff]
        %v259 = vld [vmem:[%s221 + $0x60] sm:$0xff]
        %v260 = vld [vmem:[%s221 + $0x70] sm:$0xff]
        %vm261 = vcmask 64512
        %v262 = vsel %vm261, %v253, 0.0
        %263 = vadd.xlane.f32.xlu0 %v262
        %v264 = vpop.xlane.xlu0 %263
        %v265 = vsel %vm261, %v254, 0.0
        %266 = vadd.xlane.f32.xlu0 %v265
        %v267 = vpop.xlane.xlu0 %266
        %v268 = vsel %vm261, %v255, 0.0
        %269 = vadd.xlane.f32.xlu0 %v268
        %v270 = vpop.xlane.xlu0 %269
        %v271 = vsel %vm261, %v256, 0.0
        %272 = vadd.xlane.f32.xlu0 %v271
        %v273 = vpop.xlane.xlu0 %272
        %v274 = vsel %vm261, %v257, 0.0
        %275 = vadd.xlane.f32.xlu0 %v274
        %v276 = vpop.xlane.xlu0 %275
        %v277 = vsel %vm261, %v258, 0.0
        %278 = vadd.xlane.f32.xlu0 %v277
        %v279 = vpop.xlane.xlu0 %278
        %v280 = vsel %vm261, %v259, 0.0
        %281 = vadd.xlane.f32.xlu0 %v280
        %v282 = vpop.xlane.xlu0 %281
        %v283 = vsel %vm261, %v260, 0.0
        %284 = vadd.xlane.f32.xlu0 %v283
        %v285 = vpop.xlane.xlu0 %284
        %s286 = scalar_lea.vmem %s221, 8 [#allocation2]
        %v287 = vld [vmem:[%s286] sm:$0xff]
        %v288 = vld [vmem:[%s286 + $0x10] sm:$0xff]
        %v289 = vld [vmem:[%s286 + $0x20] sm:$0xff]
        %v290 = vld [vmem:[%s286 + $0x30] sm:$0xff]
        %v291 = vld [vmem:[%s286 + $0x40] sm:$0xff]
        %v292 = vld [vmem:[%s286 + $0x50] sm:$0xff]
        %v293 = vld [vmem:[%s286 + $0x60] sm:$0xff]
        %v294 = vld [vmem:[%s286 + $0x70] sm:$0xff]
        %v295 = vsel %vm261, %v287, 0.0
        %296 = vadd.xlane.f32.xlu0 %v295
        %v297 = vpop.xlane.xlu0 %296
        %v298 = vsel %vm261, %v288, 0.0
        %299 = vadd.xlane.f32.xlu0 %v298
        %v300 = vpop.xlane.xlu0 %299
        %v301 = vsel %vm261, %v289, 0.0
        %302 = vadd.xlane.f32.xlu0 %v301
        %v303 = vpop.xlane.xlu0 %302
        %v304 = vsel %vm261, %v290, 0.0
        %305 = vadd.xlane.f32.xlu0 %v304
        %v306 = vpop.xlane.xlu0 %305
        %v307 = vsel %vm261, %v291, 0.0
        %308 = vadd.xlane.f32.xlu0 %v307
        %v309 = vpop.xlane.xlu0 %308
        %v310 = vsel %vm261, %v292, 0.0
        %311 = vadd.xlane.f32.xlu0 %v310
        %v312 = vpop.xlane.xlu0 %311
        %v313 = vsel %vm261, %v293, 0.0
        %314 = vadd.xlane.f32.xlu0 %v313
        %v315 = vpop.xlane.xlu0 %314
        %v316 = vsel %vm261, %v294, 0.0
        %317 = vadd.xlane.f32.xlu0 %v316
        %v318 = vpop.xlane.xlu0 %317
        %v319 = vadd.f32 %v264, %v297
        %v320 = vadd.f32 %v267, %v300
        %v321 = vadd.f32 %v270, %v303
        %v322 = vadd.f32 %v273, %v306
        %v323 = vadd.f32 %v276, %v309
        %v324 = vadd.f32 %v279, %v312
        %v325 = vadd.f32 %v282, %v315
        %v326 = vadd.f32 %v285, %v318
        %v327 = vmul.f32 %v319, 0.0625
        %v328 = vmul.f32 %v320, 0.0625
        %v329 = vmul.f32 %v321, 0.0625
        %v330 = vmul.f32 %v322, 0.0625
        %v331 = vmul.f32 %v323, 0.0625
        %v332 = vmul.f32 %v324, 0.0625
        %v333 = vmul.f32 %v325, 0.0625
        %v334 = vmul.f32 %v326, 0.0625
        %v335 = vsub.f32 %v253, %v327
        %v336 = vsub.f32 %v254, %v328
        %v337 = vsub.f32 %v255, %v329
        %v338 = vsub.f32 %v256, %v330
        %v339 = vsub.f32 %v257, %v331
        %v340 = vsub.f32 %v258, %v332
        %v341 = vsub.f32 %v259, %v333
        %v342 = vsub.f32 %v260, %v334
        %v343 = vmul.f32 %v335, %v335
        %v344 = vmul.f32 %v336, %v336
        %v345 = vmul.f32 %v337, %v337
        %v346 = vmul.f32 %v338, %v338
        %v347 = vmul.f32 %v339, %v339
        %v348 = vmul.f32 %v340, %v340
        %v349 = vmul.f32 %v341, %v341
        %v350 = vmul.f32 %v342, %v342
        %v351 = vsel %vm261, %v343, 0.0
        %352 = vadd.xlane.f32.xlu0 %v351
        %v353 = vpop.xlane.xlu0 %352
        %v354 = vsel %vm261, %v344, 0.0
        %355 = vadd.xlane.f32.xlu0 %v354
        %v356 = vpop.xlane.xlu0 %355
        %v357 = vsel %vm261, %v345, 0.0
        %358 = vadd.xlane.f32.xlu0 %v357
        %v359 = vpop.xlane.xlu0 %358
        %v360 = vsel %vm261, %v346, 0.0
        %361 = vadd.xlane.f32.xlu0 %v360
        %v362 = vpop.xlane.xlu0 %361
        %v363 = vsel %vm261, %v347, 0.0
        %364 = vadd.xlane.f32.xlu0 %v363
        %v365 = vpop.xlane.xlu0 %364
        %v366 = vsel %vm261, %v348, 0.0
        %367 = vadd.xlane.f32.xlu0 %v366
        %v368 = vpop.xlane.xlu0 %367
        %v369 = vsel %vm261, %v349, 0.0
        %370 = vadd.xlane.f32.xlu0 %v369
        %v371 = vpop.xlane.xlu0 %370
        %v372 = vsel %vm261, %v350, 0.0
        %373 = vadd.xlane.f32.xlu0 %v372
        %v374 = vpop.xlane.xlu0 %373
        %v375 = vadd.f32 %v353, 0.0
        %v376 = vadd.f32 %v356, 0.0
        %v377 = vadd.f32 %v359, 0.0
        %v378 = vadd.f32 %v362, 0.0
        %v379 = vadd.f32 %v365, 0.0
        %v380 = vadd.f32 %v368, 0.0
        %v381 = vadd.f32 %v371, 0.0
        %v382 = vadd.f32 %v374, 0.0
        %v383 = vsub.f32 %v287, %v327
        %v384 = vsub.f32 %v288, %v328
        %v385 = vsub.f32 %v289, %v329
        %v386 = vsub.f32 %v290, %v330
        %v387 = vsub.f32 %v291, %v331
        %v388 = vsub.f32 %v292, %v332
        %v389 = vsub.f32 %v293, %v333
        %v390 = vsub.f32 %v294, %v334
        %v391 = vmul.f32 %v383, %v383
        %v392 = vmul.f32 %v384, %v384
        %v393 = vmul.f32 %v385, %v385
        %v394 = vmul.f32 %v386, %v386
        %v395 = vmul.f32 %v387, %v387
        %v396 = vmul.f32 %v388, %v388
        %v397 = vmul.f32 %v389, %v389
        %v398 = vmul.f32 %v390, %v390
        %v399 = vsel %vm261, %v391, 0.0
        %400 = vadd.xlane.f32.xlu0 %v399
        %v401 = vpop.xlane.xlu0 %400
        %v402 = vsel %vm261, %v392, 0.0
        %403 = vadd.xlane.f32.xlu0 %v402
        %v404 = vpop.xlane.xlu0 %403
        %v405 = vsel %vm261, %v393, 0.0
        %406 = vadd.xlane.f32.xlu0 %v405
        %v407 = vpop.xlane.xlu0 %406
        %v408 = vsel %vm261, %v394, 0.0
        %409 = vadd.xlane.f32.xlu0 %v408
        %v410 = vpop.xlane.xlu0 %409
        %v411 = vsel %vm261, %v395, 0.0
        %412 = vadd.xlane.f32.xlu0 %v411
        %v413 = vpop.xlane.xlu0 %412
        %v414 = vsel %vm261, %v396, 0.0
        %415 = vadd.xlane.f32.xlu0 %v414
        %v416 = vpop.xlane.xlu0 %415
        %v417 = vsel %vm261, %v397, 0.0
        %418 = vadd.xlane.f32.xlu0 %v417
        %v419 = vpop.xlane.xlu0 %418
        %v420 = vsel %vm261, %v398, 0.0
        %421 = vadd.xlane.f32.xlu0 %v420
        %v422 = vpop.xlane.xlu0 %421
        %v423 = vadd.f32 %v375, %v401
        %v424 = vadd.f32 %v376, %v404
        %v425 = vadd.f32 %v377, %v407
        %v426 = vadd.f32 %v378, %v410
        %v427 = vadd.f32 %v379, %v413
        %v428 = vadd.f32 %v380, %v416
        %v429 = vadd.f32 %v381, %v419
        %v430 = vadd.f32 %v382, %v422
        %v431 = vmul.f32 %v423, 0.0625
        %v432 = vmul.f32 %v424, 0.0625
        %v433 = vmul.f32 %v425, 0.0625
        %v434 = vmul.f32 %v426, 0.0625
        %v435 = vmul.f32 %v427, 0.0625
        %v436 = vmul.f32 %v428, 0.0625
        %v437 = vmul.f32 %v429, 0.0625
        %v438 = vmul.f32 %v430, 0.0625
        %v439 = vadd.f32 %v431, 1e-05
        %v440 = vadd.f32 %v432, 1e-05
        %v441 = vadd.f32 %v433, 1e-05
        %v442 = vadd.f32 %v434, 1e-05
        %v443 = vadd.f32 %v435, 1e-05
        %v444 = vadd.f32 %v436, 1e-05
        %v445 = vadd.f32 %v437, 1e-05
        %v446 = vadd.f32 %v438, 1e-05
        %v447 = vrsqrt.pop %v439
        %v448 = vrsqrt.pop %v440
        %v449 = vrsqrt.pop %v441
        %v450 = vrsqrt.pop %v442
        %v451 = vrsqrt.pop %v443
        %v452 = vrsqrt.pop %v444
        %v453 = vrsqrt.pop %v445
        %v454 = vrsqrt.pop %v446
        %v455 = vmul.f32 %v335, %v447
        %v456 = vmul.f32 %v336, %v448
        %v457 = vmul.f32 %v337, %v449
        %v458 = vmul.f32 %v338, %v450
        %v459 = vmul.f32 %v339, %v451
        %v460 = vmul.f32 %v340, %v452
        %v461 = vmul.f32 %v341, %v453
        %v462 = vmul.f32 %v342, %v454
        %v463 = vld [vmem:[%s2] sm:$0x1]
        %v465 = vlaneseq
        %v466 = vshrl.u32 %v465, 7
        %v467 = vsub.s32 0, %v466
        %v468 = vrot.slane %v463, %v467
        %v470 = vmul.f32 %v455, %v468
        %v471 = vmul.f32 %v456, %v468
        %v472 = vmul.f32 %v457, %v468
        %v473 = vmul.f32 %v458, %v468
        %v474 = vmul.f32 %v459, %v468
        %v475 = vmul.f32 %v460, %v468
        %v476 = vmul.f32 %v461, %v468
        %v477 = vmul.f32 %v462, %v468
        %v478 = vld [vmem:[%s3] sm:$0x1]
        %v480 = vlaneseq
        %v481 = vshrl.u32 %v480, 7
        %v482 = vsub.s32 0, %v481
        %v483 = vrot.slane %v478, %v482
        %v485 = vadd.f32 %v470, %v483
        %v486 = vadd.f32 %v471, %v483
        %v487 = vadd.f32 %v472, %v483
        %v488 = vadd.f32 %v473, %v483
        %v489 = vadd.f32 %v474, %v483
        %v490 = vadd.f32 %v475, %v483
        %v491 = vadd.f32 %v476, %v483
        %v492 = vadd.f32 %v477, %v483
        %v493 = vld [vmem:[#allocation5] sm:$0xff]
        %v494 = vmul.f32 %v383, %v447
        %v495 = vmul.f32 %v384, %v448
        %v496 = vmul.f32 %v385, %v449
        %v497 = vmul.f32 %v386, %v450
        %v498 = vmul.f32 %v387, %v451
        %v499 = vmul.f32 %v388, %v452
        %v500 = vmul.f32 %v389, %v453
        %v501 = vmul.f32 %v390, %v454
        %s502 = scalar_lea.vmem %s2, 1
        %v503 = vld [vmem:[%s502] sm:$0x1]
        %v505 = vlaneseq
        %v506 = vshrl.u32 %v505, 7
        %v507 = vsub.s32 0, %v506
        %v508 = vrot.slane %v503, %v507
        %v510 = vmul.f32 %v494, %v508
        %v511 = vmul.f32 %v495, %v508
        %v512 = vmul.f32 %v496, %v508
        %v513 = vmul.f32 %v497, %v508
        %v514 = vmul.f32 %v498, %v508
        %v515 = vmul.f32 %v499, %v508
        %v516 = vmul.f32 %v500, %v508
        %v517 = vmul.f32 %v501, %v508
        %s518 = scalar_lea.vmem %s3, 1
        %v519 = vld [vmem:[%s518] sm:$0x1]
        %v521 = vlaneseq
        %v522 = vshrl.u32 %v521, 7
        %v523 = vsub.s32 0, %v522
        %v524 = vrot.slane %v519, %v523
        %v526 = vadd.f32 %v510, %v524
        %v527 = vadd.f32 %v511, %v524
        %v528 = vadd.f32 %v512, %v524
        %v529 = vadd.f32 %v513, %v524
        %v530 = vadd.f32 %v514, %v524
        %v531 = vadd.f32 %v515, %v524
        %v532 = vadd.f32 %v516, %v524
        %v533 = vadd.f32 %v517, %v524
        %s534 = scalar_lea.vmem [#allocation5], 8
        %v535 = vld [vmem:[%s534] sm:$0xff]
        %v537 = vsel %vm261, %v526, 0
        %v540 = vsel %vm261, %v527, 0
        %v543 = vsel %vm261, %v528, 0
        %v546 = vsel %vm261, %v529, 0
        %v549 = vsel %vm261, %v530, 0
        %v552 = vsel %vm261, %v531, 0
        %v555 = vsel %vm261, %v532, 0
        %v558 = vsel %vm261, %v533, 0
        %560 = vmatprep.subr.mxu0 0.0
        %561 = vmatpush1.msra.mxu0 0.0
        %562 = vmatprep.subr.mxu0 0.0
        %563 = vmatpush1.msra.mxu0 0.0
        %564 = vmatprep.subr.mxu0 0.0
        %565 = vmatpush1.msra.mxu0 0.0
        %566 = vmatprep.subr.mxu0 0.0
        %567 = vmatpush1.msra.mxu0 0.0
        %568 = vmatprep.subr.mxu0 0.0
        %569 = vmatpush1.msra.mxu0 0.0
        %570 = vmatprep.subr.mxu0 0.0
        %571 = vmatpush1.msra.mxu0 0.0
        %572 = vmatprep.subr.mxu0 0.0
        %573 = vmatpush1.msra.mxu0 0.0
        %574 = vmatprep.subr.mxu0 0.0
        %575 = vmatpush1.msra.mxu0 0.0
        %576 = vmatprep.subr.mxu0 0.0
        %577 = vmatpush1.msra.mxu0 0.0
        %578 = vmatprep.subr.mxu0 0.0
        %579 = vmatpush1.msra.mxu0 0.0
        %580 = vmatprep.subr.mxu0 0.0
        %581 = vmatpush1.msra.mxu0 0.0
        %582 = vmatprep.subr.mxu0 0.0
        %583 = vmatpush1.msra.mxu0 0.0
        %584 = vmatprep.subr.mxu0 0.0
        %585 = vmatpush1.msra.mxu0 0.0
        %586 = vmatprep.subr.mxu0 0.0
        %587 = vmatpush1.msra.mxu0 0.0
        %588 = vmatprep.subr.mxu0 0.0
        %589 = vmatpush1.msra.mxu0 0.0
        %590 = vmatprep.subr.mxu0 0.0
        %591 = vmatpush1.msra.mxu0 %v535
        %592 = vmatprep.subr.mxu0 0.0
        %593 = vmatpush2.msra.mxu0 0.0
        %594 = vmatprep.subr.mxu0 0.0
        %595 = vmatpush2.msra.mxu0 0.0
        %596 = vmatprep.subr.mxu0 0.0
        %597 = vmatpush2.msra.mxu0 0.0
        %598 = vmatprep.subr.mxu0 0.0
        %599 = vmatpush2.msra.mxu0 0.0
        %600 = vmatprep.subr.mxu0 0.0
        %601 = vmatpush2.msra.mxu0 0.0
        %602 = vmatprep.subr.mxu0 0.0
        %603 = vmatpush2.msra.mxu0 0.0
        %604 = vmatprep.subr.mxu0 0.0
        %605 = vmatpush2.msra.mxu0 0.0
        %606 = vmatprep.subr.mxu0 0.0
        %607 = vmatpush2.msra.mxu0 0.0
        %608 = vmatprep.subr.mxu0 0.0
        %609 = vmatpush2.msra.mxu0 0.0
        %610 = vmatprep.subr.mxu0 0.0
        %611 = vmatpush2.msra.mxu0 0.0
        %612 = vmatprep.subr.mxu0 0.0
        %613 = vmatpush2.msra.mxu0 0.0
        %614 = vmatprep.subr.mxu0 0.0
        %615 = vmatpush2.msra.mxu0 0.0
        %616 = vmatprep.subr.mxu0 0.0
        %617 = vmatpush2.msra.mxu0 0.0
        %618 = vmatprep.subr.mxu0 0.0
        %619 = vmatpush2.msra.mxu0 0.0
        %620 = vmatprep.subr.mxu0 0.0
        %621 = vmatpush2.msra.mxu0 0.0
        %622 = vmatprep.subr.mxu0 0.0
        %623 = vmatpush2.msra.mxu0 0.0
        %624 = vmatprep.mubr.f32.mxu0 0.0
        %625 = vmatmul.mubr.f32.gmra.mxu0 %v537
        %v626 = vpop.f32.mrf.mxu0
        %v627 = vadd.f32 0.0, %v626
        %v628 = vpop.f32.mrf.mxu0
        %629 = vmatprep.mubr.f32.mxu0 0.0
        %630 = vmatmul.mubr.f32.gmra.mxu0 %v540
        %v631 = vpop.f32.mrf.mxu0
        %v632 = vadd.f32 0.0, %v631
        %v633 = vpop.f32.mrf.mxu0
        %634 = vmatprep.mubr.f32.mxu0 0.0
        %635 = vmatmul.mubr.f32.gmra.mxu0 %v543
        %v636 = vpop.f32.mrf.mxu0
        %v637 = vadd.f32 0.0, %v636
        %v638 = vpop.f32.mrf.mxu0
        %639 = vmatprep.mubr.f32.mxu0 0.0
        %640 = vmatmul.mubr.f32.gmra.mxu0 %v546
        %v641 = vpop.f32.mrf.mxu0
        %v642 = vadd.f32 0.0, %v641
        %v643 = vpop.f32.mrf.mxu0
        %644 = vmatprep.mubr.f32.mxu0 0.0
        %645 = vmatmul.mubr.f32.gmra.mxu0 %v549
        %v646 = vpop.f32.mrf.mxu0
        %v647 = vadd.f32 0.0, %v646
        %v648 = vpop.f32.mrf.mxu0
        %649 = vmatprep.mubr.f32.mxu0 0.0
        %650 = vmatmul.mubr.f32.gmra.mxu0 %v552
        %v651 = vpop.f32.mrf.mxu0
        %v652 = vadd.f32 0.0, %v651
        %v653 = vpop.f32.mrf.mxu0
        %654 = vmatprep.mubr.f32.mxu0 0.0
        %655 = vmatmul.mubr.f32.gmra.mxu0 %v555
        %v656 = vpop.f32.mrf.mxu0
        %v657 = vadd.f32 0.0, %v656
        %v658 = vpop.f32.mrf.mxu0
        %659 = vmatprep.mubr.f32.mxu0 0.0
        %660 = vmatmul.mubr.f32.gmra.mxu0 %v558
        %v661 = vpop.f32.mrf.mxu0
        %v662 = vadd.f32 0.0, %v661
        %v663 = vpop.f32.mrf.mxu0
        %664 = vdwg.mxu0
        %v666 = vsel %vm261, %v485, 0
        %v669 = vsel %vm261, %v486, 0
        %v672 = vsel %vm261, %v487, 0
        %v675 = vsel %vm261, %v488, 0
        %v678 = vsel %vm261, %v489, 0
        %v681 = vsel %vm261, %v490, 0
        %v684 = vsel %vm261, %v491, 0
        %v687 = vsel %vm261, %v492, 0
        %689 = vmatprep.subr.mxu0 0.0
        %690 = vmatpush1.msra.mxu0 0.0
        %691 = vmatprep.subr.mxu0 0.0
        %692 = vmatpush1.msra.mxu0 0.0
        %693 = vmatprep.subr.mxu0 0.0
        %694 = vmatpush1.msra.mxu0 0.0
        %695 = vmatprep.subr.mxu0 0.0
        %696 = vmatpush1.msra.mxu0 0.0
        %697 = vmatprep.subr.mxu0 0.0
        %698 = vmatpush1.msra.mxu0 0.0
        %699 = vmatprep.subr.mxu0 0.0
        %700 = vmatpush1.msra.mxu0 0.0
        %701 = vmatprep.subr.mxu0 0.0
        %702 = vmatpush1.msra.mxu0 0.0
        %703 = vmatprep.subr.mxu0 0.0
        %704 = vmatpush1.msra.mxu0 0.0
        %705 = vmatprep.subr.mxu0 0.0
        %706 = vmatpush1.msra.mxu0 0.0
        %707 = vmatprep.subr.mxu0 0.0
        %708 = vmatpush1.msra.mxu0 0.0
        %709 = vmatprep.subr.mxu0 0.0
        %710 = vmatpush1.msra.mxu0 0.0
        %711 = vmatprep.subr.mxu0 0.0
        %712 = vmatpush1.msra.mxu0 0.0
        %713 = vmatprep.subr.mxu0 0.0
        %714 = vmatpush1.msra.mxu0 0.0
        %715 = vmatprep.subr.mxu0 0.0
        %716 = vmatpush1.msra.mxu0 0.0
        %717 = vmatprep.subr.mxu0 0.0
        %718 = vmatpush1.msra.mxu0 0.0
        %719 = vmatprep.subr.mxu0 0.0
        %720 = vmatpush1.msra.mxu0 %v493
        %721 = vmatprep.subr.mxu0 0.0
        %722 = vmatpush2.msra.mxu0 0.0
        %723 = vmatprep.subr.mxu0 0.0
        %724 = vmatpush2.msra.mxu0 0.0
        %725 = vmatprep.subr.mxu0 0.0
        %726 = vmatpush2.msra.mxu0 0.0
        %727 = vmatprep.subr.mxu0 0.0
        %728 = vmatpush2.msra.mxu0 0.0
        %729 = vmatprep.subr.mxu0 0.0
        %730 = vmatpush2.msra.mxu0 0.0
        %731 = vmatprep.subr.mxu0 0.0
        %732 = vmatpush2.msra.mxu0 0.0
        %733 = vmatprep.subr.mxu0 0.0
        %734 = vmatpush2.msra.mxu0 0.0
        %735 = vmatprep.subr.mxu0 0.0
        %736 = vmatpush2.msra.mxu0 0.0
        %737 = vmatprep.subr.mxu0 0.0
        %738 = vmatpush2.msra.mxu0 0.0
        %739 = vmatprep.subr.mxu0 0.0
        %740 = vmatpush2.msra.mxu0 0.0
        %741 = vmatprep.subr.mxu0 0.0
        %742 = vmatpush2.msra.mxu0 0.0
        %743 = vmatprep.subr.mxu0 0.0
        %744 = vmatpush2.msra.mxu0 0.0
        %745 = vmatprep.subr.mxu0 0.0
        %746 = vmatpush2.msra.mxu0 0.0
        %747 = vmatprep.subr.mxu0 0.0
        %748 = vmatpush2.msra.mxu0 0.0
        %749 = vmatprep.subr.mxu0 0.0
        %750 = vmatpush2.msra.mxu0 0.0
        %751 = vmatprep.subr.mxu0 0.0
        %752 = vmatpush2.msra.mxu0 0.0
        %753 = vmatprep.mubr.f32.mxu0 0.0
        %754 = vmatmul.mubr.f32.gmra.mxu0 %v666
        %v755 = vpop.f32.mrf.mxu0
        %v756 = vadd.f32 %v627, %v755
        %v757 = vpop.f32.mrf.mxu0
        %758 = vmatprep.mubr.f32.mxu0 0.0
        %759 = vmatmul.mubr.f32.gmra.mxu0 %v669
        %v760 = vpop.f32.mrf.mxu0
        %v761 = vadd.f32 %v632, %v760
        %v762 = vpop.f32.mrf.mxu0
        %763 = vmatprep.mubr.f32.mxu0 0.0
        %764 = vmatmul.mubr.f32.gmra.mxu0 %v672
        %v765 = vpop.f32.mrf.mxu0
        %v766 = vadd.f32 %v637, %v765
        %v767 = vpop.f32.mrf.mxu0
        %768 = vmatprep.mubr.f32.mxu0 0.0
        %769 = vmatmul.mubr.f32.gmra.mxu0 %v675
        %v770 = vpop.f32.mrf.mxu0
        %v771 = vadd.f32 %v642, %v770
        %v772 = vpop.f32.mrf.mxu0
        %773 = vmatprep.mubr.f32.mxu0 0.0
        %774 = vmatmul.mubr.f32.gmra.mxu0 %v678
        %v775 = vpop.f32.mrf.mxu0
        %v776 = vadd.f32 %v647, %v775
        %v777 = vpop.f32.mrf.mxu0
        %778 = vmatprep.mubr.f32.mxu0 0.0
        %779 = vmatmul.mubr.f32.gmra.mxu0 %v681
        %v780 = vpop.f32.mrf.mxu0
        %v781 = vadd.f32 %v652, %v780
        %v782 = vpop.f32.mrf.mxu0
        %783 = vmatprep.mubr.f32.mxu0 0.0
        %784 = vmatmul.mubr.f32.gmra.mxu0 %v684
        %v785 = vpop.f32.mrf.mxu0
        %v786 = vadd.f32 %v657, %v785
        %v787 = vpop.f32.mrf.mxu0
        %788 = vmatprep.mubr.f32.mxu0 0.0
        %789 = vmatmul.mubr.f32.gmra.mxu0 %v687
        %v790 = vpop.f32.mrf.mxu0
        %v791 = vadd.f32 %v662, %v790
        %v792 = vpop.f32.mrf.mxu0
        %793 = vdwg.mxu0
        %794 = vst [vmem:[%s249] sm:$0xff] %v756
        %795 = vst [vmem:[%s249 + $0x8] sm:$0xff] %v761
        %796 = vst [vmem:[%s249 + $0x10] sm:$0xff] %v766
        %797 = vst [vmem:[%s249 + $0x18] sm:$0xff] %v771
        %798 = vst [vmem:[%s249 + $0x20] sm:$0xff] %v776
        %799 = vst [vmem:[%s249 + $0x28] sm:$0xff] %v781
        %800 = vst [vmem:[%s249 + $0x30] sm:$0xff] %v786
        %801 = vst [vmem:[%s249 + $0x38] sm:$0xff] %v791
        %s802 = sand.u32 %s135, 1
        %s803 = scalar_lea.sflag [#allocation4], %s802
        %s804 = sand.u32 %s135, 1
        %s805 = smul.addr %s804, 64
        %s806 = scalar_lea.vmem [#allocation7], %s805
        // Predicated region
        $region45: #{tpu_custom_call.1} parent=35 // pred_check
          %p807 = pneg %p145
        $region46: #{tpu_custom_call.1} parent=35 // pred_check_branch
          %809 = sbr.rel (%p807) target = $region48
        $region47: #{tpu_custom_call.1} parent=35 // pred_region
          %s810 = sadd.s32 %s26, %s27
          %s811 = smul.u32 8, %s810
          %s813 = ssub.s32 1024, 1024
          %814 = vsyncadd %s803, %s813
          %s815 = smul.addr %s811, 128
          %s816 = scalar_lea.hbm %s4, %s815
          %s817 = sshll.u32 %s806, 4
          %s818 = int_to_ptr.vmem [resolvable:$true] %s817
          %823 = dma.vmem_to_hbm [thread:$0]  %s818, 1024, %s816, %s803, 128, 128, 8
        $region48: #{tpu_custom_call.1} parent=35 // pred_fallthru
          _
      $region36: #{tpu_custom_call.1} parent=5 // pred_fallthru
        _
      %p824 = scmp.le.s32.totalorder 2, %s17
      // Predicated region
      $region49: #{tpu_custom_call.1} parent=5 // pred_check
        %p825 = pneg %p824
      $region50: #{tpu_custom_call.1} parent=5 // pred_check_branch
        %827 = sbr.rel (%p825) target = $region52
      $region51: #{tpu_custom_call.1} parent=5 // pred_region
        %s828 = ssub.s32 %s17, 2
        // Predicated region
        $region53: #{tpu_custom_call.1} parent=51 // pred_check
          %p829 = pneg %p151
        $region54: #{tpu_custom_call.1} parent=51 // pred_check_branch
          %831 = sbr.rel (%p829) target = $region56
        $region55: #{tpu_custom_call.1} parent=51 // pred_region
          %s832 = sand.u32 %s136, 1
          %s833 = scalar_lea.sflag [#allocation4], %s832
          %s834 = sand.u32 %s136, 1
          %s835 = smul.addr %s834, 64
          %s836 = scalar_lea.vmem [#allocation7], %s835
          %837 = dma.done %s833, 1024
        $region56: #{tpu_custom_call.1} parent=51 // pred_fallthru
          _
      $region52: #{tpu_custom_call.1} parent=5 // pred_fallthru
        _
    $region6: #{tpu_custom_call.1} parent=1 // loop_footer
      %s21 = sadd.s32 1, %s17
    $region7: #{tpu_custom_call.1} parent=1 // loop_footer_branch
      %16 = sbr.rel target = $region3
    $region8: #{tpu_custom_call.1} parent=1 // loop_exit
      _
    %838 = vsyncpa [#allocation3], 1
    %s839 = scalar_lea.sflag [#allocation3], 1
    %840 = vsyncpa %s839, 1
    %841 = vsyncpa [#allocation6], 1
    %842 = vsyncpa [#allocation4], 1
    %s843 = scalar_lea.sflag [#allocation4], 1
    %844 = vsyncpa %s843, 1

</llo_original>
